<compile_context>
chip_gen: v5e
topology: v5e:2x2
jax: 0.10.0
libtpu: 0.0.40
codegen_flags: <defaults>
</compile_context>

<pallas_src>
import jax
import jax.numpy as jnp
from jax.experimental import pallas as pl
from jax.experimental.pallas import tpu as pltpu

F_IN, H1, H2, H3 = 144, 64, 32, 8


def _round_up(x, m):
    return ((x + m - 1) // m) * m


def _mse_model_kernel(e1_ref, e2_ref,
                      w1_ref, b1_ref,
                      w2_ref, b2_ref,
                      w3_ref, b3_ref,
                      w4_ref, b4_ref,
                      o_ref):
    """One batch tile of the full forward pass.

    projection: 144 -> 64 -> 32 -> 8 with ReLU, run once on the fused
    [e1_tile; e2_tile] block (M = 2*TB), then |p1 - p2| and the 8 -> 1 head
    as a VPU multiply + lane reduction.
    """
    tb = e1_ref.shape[0]
    cd = w1_ref.dtype  # matmul operand dtype (bf16 or f32); accumulation is f32

    # Fused towers: one big matmul per layer instead of two small ones.
    x = jnp.concatenate([e1_ref[...], e2_ref[...]], axis=0)            # (2*TB, 144)

    h = jnp.dot(x, w1_ref[...], preferred_element_type=jnp.float32) + b1_ref[...]
    h = jnp.maximum(h, 0.0).astype(cd)                                 # (2*TB, 64)
    h = jnp.dot(h, w2_ref[...], preferred_element_type=jnp.float32) + b2_ref[...]
    h = jnp.maximum(h, 0.0).astype(cd)                                 # (2*TB, 32)
    h = jnp.dot(h, w3_ref[...], preferred_element_type=jnp.float32) + b3_ref[...]
    h = jnp.maximum(h, 0.0)                                            # (2*TB, 8) f32

    d = jnp.abs(h[:tb, :] - h[tb:, :])                                 # (TB, 8) f32
    # 8 -> 1 head on the VPU: broadcast weight row, lane-reduce, add bias.
    head = jnp.sum(d * w4_ref[...], axis=-1, keepdims=True) + b4_ref[...]  # (TB, 1)
    o_ref[...] = head.astype(o_ref.dtype)


def mse_model_forward(e1, e2, params, *, compute_dtype=jnp.bfloat16, block_b=1024):
    """Batch-tiled Pallas forward. Returns shape (B,) like torch's .squeeze()."""
    B, F = e1.shape
    assert F == F_IN, F
    w1, b1, w2, b2, w3, b3, w4, b4 = params
    cd = jnp.dtype(compute_dtype)

    # Matmul operands in compute_dtype; biases / head weights stay f32.
    e1c, e2c = e1.astype(cd), e2.astype(cd)
    w1c, w2c, w3c = w1.astype(cd), w2.astype(cd), w3.astype(cd)
    b1f = b1.reshape(1, H1).astype(jnp.float32)
    b2f = b2.reshape(1, H2).astype(jnp.float32)
    b3f = b3.reshape(1, H3).astype(jnp.float32)
    w4r = w4.reshape(1, H3).astype(jnp.float32)   # head weight as a broadcastable row
    b4f = b4.reshape(1, 1).astype(jnp.float32)

    # Batch tile: multiple of 128 (and of 8), at most block_b rows.
    tb = min(_round_up(max(block_b, 128), 128), _round_up(B, 128))
    n_tiles = pl.cdiv(B, tb)
    b_pad = n_tiles * tb
    if b_pad != B:
        pad = ((0, b_pad - B), (0, 0))
        e1c = jnp.pad(e1c, pad)
        e2c = jnp.pad(e2c, pad)

    row_spec = pl.BlockSpec((tb, F_IN), lambda i: (i, 0))

    def const_spec(a):  # full-array block, same block index every grid step
        idx = (0,) * a.ndim
        return pl.BlockSpec(a.shape, lambda i, _idx=idx: _idx)

    flops = 4 * b_pad * (F_IN * H1 + H1 * H2 + H2 * H3) + 2 * b_pad * H3
    bytes_accessed = (2 * b_pad * F_IN * e1c.dtype.itemsize        # inputs
                      + b_pad * 4                                  # output
                      + sum(int(p.size) * p.dtype.itemsize
                            for p in (w1c, b1f, w2c, b2f, w3c, b3f, w4r, b4f)))

    out = pl.pallas_call(
        _mse_model_kernel,
        out_shape=jax.ShapeDtypeStruct((b_pad, 1), jnp.float32),
        grid=(n_tiles,),
        in_specs=[row_spec, row_spec,
                  const_spec(w1c), const_spec(b1f),
                  const_spec(w2c), const_spec(b2f),
                  const_spec(w3c), const_spec(b3f),
                  const_spec(w4r), const_spec(b4f)],
        out_specs=pl.BlockSpec((tb, 1), lambda i: (i, 0)),
        compiler_params=pltpu.CompilerParams(
            dimension_semantics=("parallel",),
            vmem_limit_bytes=32 * 1024 * 1024),
        cost_estimate=pl.CostEstimate(flops=flops, transcendentals=0,
                                      bytes_accessed=bytes_accessed),
    )(e1c, e2c, w1c, b1f, w2c, b2f, w3c, b3f, w4r, b4f)

    # torch .squeeze() on [B, 1] -> [B]; drop batch padding.
    return out.reshape(-1)[:B]


def init_params(key):
    """Deterministic init mimicking PyTorch Linear default (U[-1/sqrt(fan_in), +])."""
    dims = [(F_IN, H1), (H1, H2), (H2, H3), (H3, 1)]
    params = []
    for i, (fan_in, fan_out) in enumerate(dims):
        kw, kb = jax.random.split(jax.random.fold_in(key, i))
        bound = 1.0 / jnp.sqrt(fan_in)
        # stored as [in, out] (already transposed relative to torch's [out, in])
        w = jax.random.uniform(kw, (fan_in, fan_out), jnp.float32, -bound, bound)
        b = jax.random.uniform(kb, (1, fan_out), jnp.float32, -bound, bound)
        params.extend([w, b])
    return params


def reference_forward(e1, e2, params, compute_dtype=jnp.float32):
    """Pure-JAX reference mirroring the PyTorch module (and the kernel's
    mixed-precision cast pattern when compute_dtype != float32)."""
    w1, b1, w2, b2, w3, b3, w4, b4 = params
    q = lambda a: a.astype(compute_dtype).astype(jnp.float32)
    w1q, w2q, w3q = q(w1), q(w2), q(w3)

    def proj(x):
        h = jnp.maximum(q(x) @ w1q + b1, 0.0)
        h = jnp.maximum(q(h) @ w2q + b2, 0.0)
        h = jnp.maximum(q(h) @ w3q + b3, 0.0)
        return h

    d = jnp.abs(proj(e1) - proj(e2))
    return jnp.squeeze(d @ w4 + b4, axis=-1)


if __name__ == "__main__":
    key = jax.random.PRNGKey(0)
    k1, k2, kp = jax.random.split(key, 3)
    params = init_params(kp)

    # 1) Small batch, full-f32 path: tight check against the reference.
    B = 8
    e1 = jax.random.normal(k1, (B, F_IN), jnp.float32)
    e2 = jax.random.normal(k2, (B, F_IN), jnp.float32)
    out = jax.block_until_ready(
        mse_model_forward(e1, e2, params, compute_dtype=jnp.float32))
    ref = reference_forward(e1, e2, params, compute_dtype=jnp.float32)
    assert out.shape == (B,), out.shape
    assert jnp.allclose(out, ref, atol=1e-5, rtol=1e-5), (out, ref)

    # 2) Multi-tile grid + batch padding + bf16 fast path (default).
    B2 = 300
    e1b = jax.random.normal(jax.random.fold_in(k1, 1), (B2, F_IN), jnp.float32)
    e2b = jax.random.normal(jax.random.fold_in(k2, 1), (B2, F_IN), jnp.float32)
    out2 = jax.block_until_ready(
        mse_model_forward(e1b, e2b, params, block_b=128))  # forces 3 grid steps
    ref2 = reference_forward(e1b, e2b, params, compute_dtype=jnp.bfloat16)
    assert out2.shape == (B2,), out2.shape
    assert jnp.allclose(out2, ref2, atol=2e-2, rtol=2e-2), \
        float(jnp.max(jnp.abs(out2 - ref2)))

    print("KERNEL_OK")
</pallas_src>

<mosaic_0001>
module attributes {stable_mosaic.version = 11 : i64} {
  func.func @_mse_model_kernel(%arg0: i32, %arg1: memref<128x144xf32, #tpu.memory_space<vmem>>, %arg2: memref<128x144xf32, #tpu.memory_space<vmem>>, %arg3: memref<144x64xf32, #tpu.memory_space<vmem>>, %arg4: memref<1x64xf32, #tpu.memory_space<vmem>>, %arg5: memref<64x32xf32, #tpu.memory_space<vmem>>, %arg6: memref<1x32xf32, #tpu.memory_space<vmem>>, %arg7: memref<32x8xf32, #tpu.memory_space<vmem>>, %arg8: memref<1x8xf32, #tpu.memory_space<vmem>>, %arg9: memref<1x8xf32, #tpu.memory_space<vmem>>, %arg10: memref<1x1xf32, #tpu.memory_space<vmem>>, %arg11: memref<128x1xf32, #tpu.memory_space<vmem>>) attributes {dimension_semantics = [#tpu.dimension_semantics<parallel>], iteration_bounds = array<i64: 1>, scalar_prefetch = 0 : i64, scratch_operands = 0 : i64, tpu.core_type = #tpu.core_type<tc>, window_params = [{transform_indices = @transform_0, window_bounds = array<i64: 128, 144>}, {transform_indices = @transform_1, window_bounds = array<i64: 128, 144>}, {pipeline_mode = #tpu.pipeline_mode<synchronous>, transform_indices = @transform_2, window_bounds = array<i64: 144, 64>}, {pipeline_mode = #tpu.pipeline_mode<synchronous>, transform_indices = @transform_3, window_bounds = array<i64: 1, 64>}, {pipeline_mode = #tpu.pipeline_mode<synchronous>, transform_indices = @transform_4, window_bounds = array<i64: 64, 32>}, {pipeline_mode = #tpu.pipeline_mode<synchronous>, transform_indices = @transform_5, window_bounds = array<i64: 1, 32>}, {pipeline_mode = #tpu.pipeline_mode<synchronous>, transform_indices = @transform_6, window_bounds = array<i64: 32, 8>}, {pipeline_mode = #tpu.pipeline_mode<synchronous>, transform_indices = @transform_7, window_bounds = array<i64: 1, 8>}, {pipeline_mode = #tpu.pipeline_mode<synchronous>, transform_indices = @transform_8, window_bounds = array<i64: 1, 8>}, {pipeline_mode = #tpu.pipeline_mode<synchronous>, transform_indices = @transform_9, window_bounds = array<i64: 1, 1>}, {transform_indices = @transform_10, window_bounds = array<i64: 128, 1>}]} {
    %c0 = arith.constant 0 : index
    %c0_0 = arith.constant 0 : index
    %0 = vector.load %arg1[%c0, %c0_0] : memref<128x144xf32, #tpu.memory_space<vmem>>, vector<128x144xf32>
    %c0_1 = arith.constant 0 : index
    %c0_2 = arith.constant 0 : index
    %1 = vector.load %arg2[%c0_1, %c0_2] : memref<128x144xf32, #tpu.memory_space<vmem>>, vector<128x144xf32>
    %2 = tpu.concatenate %0, %1 in 0 : vector<128x144xf32>, vector<128x144xf32> -> vector<256x144xf32>
    %c0_3 = arith.constant 0 : index
    %c0_4 = arith.constant 0 : index
    %3 = vector.load %arg3[%c0_3, %c0_4] : memref<144x64xf32, #tpu.memory_space<vmem>>, vector<144x64xf32>
    %cst = arith.constant dense<0.000000e+00> : vector<256x64xf32>
    %4 = tpu.matmul %2, %3, %cst {dimension_numbers = #tpu.dot_dimension_numbers<[1], [0], [0], [1], [0, 0, 1, 1], [], []>} : vector<256x144xf32>, vector<144x64xf32>, vector<256x64xf32> -> vector<256x64xf32>
    %c0_5 = arith.constant 0 : index
    %c0_6 = arith.constant 0 : index
    %5 = vector.load %arg4[%c0_5, %c0_6] : memref<1x64xf32, #tpu.memory_space<vmem>>, vector<1x64xf32>
    %6 = vector.broadcast %5 : vector<1x64xf32> to vector<256x64xf32>
    %7 = arith.addf %4, %6 : vector<256x64xf32>
    %cst_7 = arith.constant 0.000000e+00 : f32
    %8 = vector.broadcast %cst_7 : f32 to vector<256x64xf32>
    %9 = arith.maximumf %7, %8 : vector<256x64xf32>
    %c0_8 = arith.constant 0 : index
    %c0_9 = arith.constant 0 : index
    %10 = vector.load %arg5[%c0_8, %c0_9] : memref<64x32xf32, #tpu.memory_space<vmem>>, vector<64x32xf32>
    %cst_10 = arith.constant dense<0.000000e+00> : vector<256x32xf32>
    %11 = tpu.matmul %9, %10, %cst_10 {dimension_numbers = #tpu.dot_dimension_numbers<[1], [0], [0], [1], [0, 0, 1, 1], [], []>} : vector<256x64xf32>, vector<64x32xf32>, vector<256x32xf32> -> vector<256x32xf32>
    %c0_11 = arith.constant 0 : index
    %c0_12 = arith.constant 0 : index
    %12 = vector.load %arg6[%c0_11, %c0_12] : memref<1x32xf32, #tpu.memory_space<vmem>>, vector<1x32xf32>
    %13 = vector.broadcast %12 : vector<1x32xf32> to vector<256x32xf32>
    %14 = arith.addf %11, %13 : vector<256x32xf32>
    %cst_13 = arith.constant 0.000000e+00 : f32
    %15 = vector.broadcast %cst_13 : f32 to vector<256x32xf32>
    %16 = arith.maximumf %14, %15 : vector<256x32xf32>
    %c0_14 = arith.constant 0 : index
    %c0_15 = arith.constant 0 : index
    %17 = vector.load %arg7[%c0_14, %c0_15] : memref<32x8xf32, #tpu.memory_space<vmem>>, vector<32x8xf32>
    %cst_16 = arith.constant dense<0.000000e+00> : vector<256x8xf32>
    %18 = tpu.matmul %16, %17, %cst_16 {dimension_numbers = #tpu.dot_dimension_numbers<[1], [0], [0], [1], [0, 0, 1, 1], [], []>} : vector<256x32xf32>, vector<32x8xf32>, vector<256x8xf32> -> vector<256x8xf32>
    %c0_17 = arith.constant 0 : index
    %c0_18 = arith.constant 0 : index
    %19 = vector.load %arg8[%c0_17, %c0_18] : memref<1x8xf32, #tpu.memory_space<vmem>>, vector<1x8xf32>
    %20 = vector.broadcast %19 : vector<1x8xf32> to vector<256x8xf32>
    %21 = arith.addf %18, %20 : vector<256x8xf32>
    %cst_19 = arith.constant 0.000000e+00 : f32
    %22 = vector.broadcast %cst_19 : f32 to vector<256x8xf32>
    %23 = arith.maximumf %21, %22 : vector<256x8xf32>
    %24 = vector.extract_strided_slice %23 {offsets = [0, 0], sizes = [128, 8], strides = [1, 1]} : vector<256x8xf32> to vector<128x8xf32>
    %25 = vector.extract_strided_slice %23 {offsets = [128, 0], sizes = [128, 8], strides = [1, 1]} : vector<256x8xf32> to vector<128x8xf32>
    %26 = arith.subf %24, %25 : vector<128x8xf32>
    %27 = math.absf %26 : vector<128x8xf32>
    %c0_20 = arith.constant 0 : index
    %c0_21 = arith.constant 0 : index
    %28 = vector.load %arg9[%c0_20, %c0_21] : memref<1x8xf32, #tpu.memory_space<vmem>>, vector<1x8xf32>
    %29 = vector.broadcast %28 : vector<1x8xf32> to vector<128x8xf32>
    %30 = arith.mulf %27, %29 : vector<128x8xf32>
    %cst_22 = arith.constant dense<0.000000e+00> : vector<128xf32>
    %31 = vector.multi_reduction <add>, %30, %cst_22 [1] : vector<128x8xf32> to vector<128xf32>
    %32 = vector.shape_cast %31 : vector<128xf32> to vector<128x1xf32>
    %c0_23 = arith.constant 0 : index
    %c0_24 = arith.constant 0 : index
    %33 = vector.load %arg10[%c0_23, %c0_24] : memref<1x1xf32, #tpu.memory_space<vmem>>, vector<1x1xf32>
    %34 = vector.broadcast %33 : vector<1x1xf32> to vector<128x1xf32>
    %35 = arith.addf %32, %34 : vector<128x1xf32>
    %c0_25 = arith.constant 0 : index
    %c0_26 = arith.constant 0 : index
    %36 = vector.load %arg11[%c0_25, %c0_26] : memref<128x1xf32, #tpu.memory_space<vmem>>, vector<128x1xf32>
    tpu.vector_store %arg11[%c0_25, %c0_26], %35 {strides = array<i32>} : memref<128x1xf32, #tpu.memory_space<vmem>>, vector<128x1xf32>,
    return
  }
  func.func @transform_0(%arg0: i32) -> (i32, i32) {
    %c0_i32 = arith.constant 0 : i32
    %c0_i32_0 = arith.constant 0 : i32
    return %arg0, %c0_i32 : i32, i32
  }
  func.func @transform_1(%arg0: i32) -> (i32, i32) {
    %c0_i32 = arith.constant 0 : i32
    %c0_i32_0 = arith.constant 0 : i32
    return %arg0, %c0_i32 : i32, i32
  }
  func.func @transform_2(%arg0: i32) -> (i32, i32) {
    %c0_i32 = arith.constant 0 : i32
    %c0_i32_0 = arith.constant 0 : i32
    %c0_i32_1 = arith.constant 0 : i32
    return %c0_i32, %c0_i32_0 : i32, i32
  }
  func.func @transform_3(%arg0: i32) -> (i32, i32) {
    %c0_i32 = arith.constant 0 : i32
    %c0_i32_0 = arith.constant 0 : i32
    %c0_i32_1 = arith.constant 0 : i32
    return %c0_i32, %c0_i32_0 : i32, i32
  }
  func.func @transform_4(%arg0: i32) -> (i32, i32) {
    %c0_i32 = arith.constant 0 : i32
    %c0_i32_0 = arith.constant 0 : i32
    %c0_i32_1 = arith.constant 0 : i32
    return %c0_i32, %c0_i32_0 : i32, i32
  }
  func.func @transform_5(%arg0: i32) -> (i32, i32) {
    %c0_i32 = arith.constant 0 : i32
    %c0_i32_0 = arith.constant 0 : i32
    %c0_i32_1 = arith.constant 0 : i32
    return %c0_i32, %c0_i32_0 : i32, i32
  }
  func.func @transform_6(%arg0: i32) -> (i32, i32) {
    %c0_i32 = arith.constant 0 : i32
    %c0_i32_0 = arith.constant 0 : i32
    %c0_i32_1 = arith.constant 0 : i32
    return %c0_i32, %c0_i32_0 : i32, i32
  }
  func.func @transform_7(%arg0: i32) -> (i32, i32) {
    %c0_i32 = arith.constant 0 : i32
    %c0_i32_0 = arith.constant 0 : i32
    %c0_i32_1 = arith.constant 0 : i32
    return %c0_i32, %c0_i32_0 : i32, i32
  }
  func.func @transform_8(%arg0: i32) -> (i32, i32) {
    %c0_i32 = arith.constant 0 : i32
    %c0_i32_0 = arith.constant 0 : i32
    %c0_i32_1 = arith.constant 0 : i32
    return %c0_i32, %c0_i32_0 : i32, i32
  }
  func.func @transform_9(%arg0: i32) -> (i32, i32) {
    %c0_i32 = arith.constant 0 : i32
    %c0_i32_0 = arith.constant 0 : i32
    %c0_i32_1 = arith.constant 0 : i32
    return %c0_i32, %c0_i32_0 : i32, i32
  }
  func.func @transform_10(%arg0: i32) -> (i32, i32) {
    %c0_i32 = arith.constant 0 : i32
    %c0_i32_0 = arith.constant 0 : i32
    return %arg0, %c0_i32 : i32, i32
  }
}

</mosaic_0001>

<llo_original>
// kernel: tpu_custom_call.1
$region0: #{tpu_custom_call.1}
  #allocation0 [shape = 'u32[]', space=smem, size = 0x4, offset = 0x4, fixed_abs, tag = 'smem constant byte address 0x4 - core index']
  #allocation1 [shape = 'u32[72,128]{1,0:T(1,128)}', space=vmem, size = 0x9000, scoped, tag = 'internal scratch']
  #allocation2 [shape = 'f32[1,1]{1,0:T(1,128)S(1)}', space=vmem, size = 0x200, scoped, tag = 'scoped memory for tpu_custom_call.1']
  %s0 = inlined_call_operand.vmem [shape: f32[128,144], index: 0, kind: input, shape index: {}]
  %s1 = inlined_call_operand.vmem [shape: f32[128,144], index: 1, kind: input, shape index: {}]
  %s2 = inlined_call_operand.vmem [shape: f32[144,64], index: 2, kind: input, shape index: {}]
  %s3 = inlined_call_operand.vmem [shape: f32[1,64], index: 3, kind: input, shape index: {}]
  %s4 = inlined_call_operand.vmem [shape: f32[64,32], index: 4, kind: input, shape index: {}]
  %s5 = inlined_call_operand.vmem [shape: f32[1,32], index: 5, kind: input, shape index: {}]
  %s6 = inlined_call_operand.vmem [shape: f32[32,8], index: 6, kind: input, shape index: {}]
  %s7 = inlined_call_operand.vmem [shape: f32[1,8], index: 7, kind: input, shape index: {}]
  %s8 = inlined_call_operand.vmem [shape: f32[1,8], index: 8, kind: input, shape index: {}]
  %s9 = inlined_call_operand.<no memory space> [shape: f32[1,1], index: 9, kind: input, shape index: {}]
  %s10 = inlined_call_operand.vmem [shape: f32[128,1], index: 10, kind: output, shape index: {}]
  %s11 = sld [smem:[#allocation0]]
  $region50: #{tpu_custom_call.1} parent=0
    _
  %s13 = ssub.s32 1, %s11
  %s14 = scalar_select 0, %s13, %s11
  %v15 = vstv %s9
  %16 = vst [vmem:[#allocation2] sm:$0x1] %v15
  // Predicated region
  $region2: #{tpu_custom_call.1} parent=0 // pred_check
    _
  $region3: #{tpu_custom_call.1} parent=0 // pred_check_branch
    %18 = sbr.rel (0) target = $region5
  $region4: #{tpu_custom_call.1} parent=0 // pred_region
    _
  $region5: #{tpu_custom_call.1} parent=0 // pred_fallthru
    _
  // Predicated region
  $region6: #{tpu_custom_call.1} parent=0 // pred_check
    _
  $region7: #{tpu_custom_call.1} parent=0 // pred_check_branch
    %20 = sbr.rel (0) target = $region9
  $region8: #{tpu_custom_call.1} parent=0 // pred_region
    _
  $region9: #{tpu_custom_call.1} parent=0 // pred_fallthru
    _
  // Predicated region
  $region10: #{tpu_custom_call.1} parent=0 // pred_check
    _
  $region11: #{tpu_custom_call.1} parent=0 // pred_check_branch
    %22 = sbr.rel (0) target = $region13
  $region12: #{tpu_custom_call.1} parent=0 // pred_region
    _
  $region13: #{tpu_custom_call.1} parent=0 // pred_fallthru
    _
  // Predicated region
  $region14: #{tpu_custom_call.1} parent=0 // pred_check
    _
  $region15: #{tpu_custom_call.1} parent=0 // pred_check_branch
    %24 = sbr.rel (0) target = $region17
  $region16: #{tpu_custom_call.1} parent=0 // pred_region
    _
  $region17: #{tpu_custom_call.1} parent=0 // pred_fallthru
    _
  // Predicated region
  $region18: #{tpu_custom_call.1} parent=0 // pred_check
    _
  $region19: #{tpu_custom_call.1} parent=0 // pred_check_branch
    %26 = sbr.rel (0) target = $region21
  $region20: #{tpu_custom_call.1} parent=0 // pred_region
    _
  $region21: #{tpu_custom_call.1} parent=0 // pred_fallthru
    _
  // Predicated region
  $region22: #{tpu_custom_call.1} parent=0 // pred_check
    _
  $region23: #{tpu_custom_call.1} parent=0 // pred_check_branch
    %28 = sbr.rel (0) target = $region25
  $region24: #{tpu_custom_call.1} parent=0 // pred_region
    _
  $region25: #{tpu_custom_call.1} parent=0 // pred_fallthru
    _
  // Predicated region
  $region26: #{tpu_custom_call.1} parent=0 // pred_check
    _
  $region27: #{tpu_custom_call.1} parent=0 // pred_check_branch
    %30 = sbr.rel (0) target = $region29
  $region28: #{tpu_custom_call.1} parent=0 // pred_region
    _
  $region29: #{tpu_custom_call.1} parent=0 // pred_fallthru
    _
  // Predicated region
  $region30: #{tpu_custom_call.1} parent=0 // pred_check
    _
  $region31: #{tpu_custom_call.1} parent=0 // pred_check_branch
    %32 = sbr.rel (0) target = $region33
  $region32: #{tpu_custom_call.1} parent=0 // pred_region
    _
  $region33: #{tpu_custom_call.1} parent=0 // pred_fallthru
    _
  // Predicated region
  $region34: #{tpu_custom_call.1} parent=0 // pred_check
    _
  $region35: #{tpu_custom_call.1} parent=0 // pred_check_branch
    %34 = sbr.rel (0) target = $region37
  $region36: #{tpu_custom_call.1} parent=0 // pred_region
    _
  $region37: #{tpu_custom_call.1} parent=0 // pred_fallthru
    _
  // Predicated region
  $region38: #{tpu_custom_call.1} parent=0 // pred_check
    _
  $region39: #{tpu_custom_call.1} parent=0 // pred_check_branch
    %36 = sbr.rel (0) target = $region41
  $region40: #{tpu_custom_call.1} parent=0 // pred_region
    _
  $region41: #{tpu_custom_call.1} parent=0 // pred_fallthru
    _
  %v37 = vld [vmem:[%s0] sm:$0xff]
  %v38 = vld [vmem:[%s0 + $0x8] sm:$0xff]
  %v39 = vld [vmem:[%s0 + $0x10] sm:$0xff]
  %v40 = vld [vmem:[%s0 + $0x18] sm:$0xff]
  %v41 = vld [vmem:[%s0 + $0x20] sm:$0xff]
  %v42 = vld [vmem:[%s0 + $0x28] sm:$0xff]
  %v43 = vld [vmem:[%s0 + $0x30] sm:$0xff]
  %v44 = vld [vmem:[%s0 + $0x38] sm:$0xff]
  %v45 = vld [vmem:[%s0 + $0x40] sm:$0xff]
  %v46 = vld [vmem:[%s0 + $0x48] sm:$0xff]
  %v47 = vld [vmem:[%s0 + $0x50] sm:$0xff]
  %v48 = vld [vmem:[%s0 + $0x58] sm:$0xff]
  %v49 = vld [vmem:[%s0 + $0x60] sm:$0xff]
  %v50 = vld [vmem:[%s0 + $0x68] sm:$0xff]
  %v51 = vld [vmem:[%s0 + $0x70] sm:$0xff]
  %v52 = vld [vmem:[%s0 + $0x78] sm:$0xff]
  %v53 = vld [vmem:[%s0 + $0x80] sm:$0xff]
  %v54 = vld [vmem:[%s0 + $0x88] sm:$0xff]
  %v55 = vld [vmem:[%s0 + $0x90] sm:$0xff]
  %v56 = vld [vmem:[%s0 + $0x98] sm:$0xff]
  %v57 = vld [vmem:[%s0 + $0xa0] sm:$0xff]
  %v58 = vld [vmem:[%s0 + $0xa8] sm:$0xff]
  %v59 = vld [vmem:[%s0 + $0xb0] sm:$0xff]
  %v60 = vld [vmem:[%s0 + $0xb8] sm:$0xff]
  %v61 = vld [vmem:[%s0 + $0xc0] sm:$0xff]
  %v62 = vld [vmem:[%s0 + $0xc8] sm:$0xff]
  %v63 = vld [vmem:[%s0 + $0xd0] sm:$0xff]
  %v64 = vld [vmem:[%s0 + $0xd8] sm:$0xff]
  %v65 = vld [vmem:[%s0 + $0xe0] sm:$0xff]
  %v66 = vld [vmem:[%s0 + $0xe8] sm:$0xff]
  %v67 = vld [vmem:[%s0 + $0xf0] sm:$0xff]
  %v68 = vld [vmem:[%s0 + $0xf8] sm:$0xff]
  %v69 = vld [vmem:[%s1] sm:$0xff]
  %v70 = vld [vmem:[%s1 + $0x8] sm:$0xff]
  %v71 = vld [vmem:[%s1 + $0x10] sm:$0xff]
  %v72 = vld [vmem:[%s1 + $0x18] sm:$0xff]
  %v73 = vld [vmem:[%s1 + $0x20] sm:$0xff]
  %v74 = vld [vmem:[%s1 + $0x28] sm:$0xff]
  %v75 = vld [vmem:[%s1 + $0x30] sm:$0xff]
  %v76 = vld [vmem:[%s1 + $0x38] sm:$0xff]
  %v77 = vld [vmem:[%s1 + $0x40] sm:$0xff]
  %v78 = vld [vmem:[%s1 + $0x48] sm:$0xff]
  %v79 = vld [vmem:[%s1 + $0x50] sm:$0xff]
  %v80 = vld [vmem:[%s1 + $0x58] sm:$0xff]
  %v81 = vld [vmem:[%s1 + $0x60] sm:$0xff]
  %v82 = vld [vmem:[%s1 + $0x68] sm:$0xff]
  %v83 = vld [vmem:[%s1 + $0x70] sm:$0xff]
  %v84 = vld [vmem:[%s1 + $0x78] sm:$0xff]
  %v85 = vld [vmem:[%s1 + $0x80] sm:$0xff]
  %v86 = vld [vmem:[%s1 + $0x88] sm:$0xff]
  %v87 = vld [vmem:[%s1 + $0x90] sm:$0xff]
  %v88 = vld [vmem:[%s1 + $0x98] sm:$0xff]
  %v89 = vld [vmem:[%s1 + $0xa0] sm:$0xff]
  %v90 = vld [vmem:[%s1 + $0xa8] sm:$0xff]
  %v91 = vld [vmem:[%s1 + $0xb0] sm:$0xff]
  %v92 = vld [vmem:[%s1 + $0xb8] sm:$0xff]
  %v93 = vld [vmem:[%s1 + $0xc0] sm:$0xff]
  %v94 = vld [vmem:[%s1 + $0xc8] sm:$0xff]
  %v95 = vld [vmem:[%s1 + $0xd0] sm:$0xff]
  %v96 = vld [vmem:[%s1 + $0xd8] sm:$0xff]
  %v97 = vld [vmem:[%s1 + $0xe0] sm:$0xff]
  %v98 = vld [vmem:[%s1 + $0xe8] sm:$0xff]
  %v99 = vld [vmem:[%s1 + $0xf0] sm:$0xff]
  %v100 = vld [vmem:[%s1 + $0xf8] sm:$0xff]
  %v101 = vld [vmem:[%s2] sm:$0xff]
  %v102 = vld [vmem:[%s2 + $0x8] sm:$0xff]
  %v103 = vld [vmem:[%s2 + $0x10] sm:$0xff]
  %v104 = vld [vmem:[%s2 + $0x18] sm:$0xff]
  %v105 = vld [vmem:[%s2 + $0x20] sm:$0xff]
  %v106 = vld [vmem:[%s2 + $0x28] sm:$0xff]
  %v107 = vld [vmem:[%s2 + $0x30] sm:$0xff]
  %v108 = vld [vmem:[%s2 + $0x38] sm:$0xff]
  %v109 = vld [vmem:[%s2 + $0x40] sm:$0xff]
  %v110 = vld [vmem:[%s2 + $0x48] sm:$0xff]
  %v111 = vld [vmem:[%s2 + $0x50] sm:$0xff]
  %v112 = vld [vmem:[%s2 + $0x58] sm:$0xff]
  %v113 = vld [vmem:[%s2 + $0x60] sm:$0xff]
  %v114 = vld [vmem:[%s2 + $0x68] sm:$0xff]
  %v115 = vld [vmem:[%s2 + $0x70] sm:$0xff]
  %v116 = vld [vmem:[%s2 + $0x78] sm:$0xff]
  %v117 = vld [vmem:[%s2 + $0x80] sm:$0xff]
  %v118 = vld [vmem:[%s2 + $0x88] sm:$0xff]
  %v119 = vld [vmem:[%s3] sm:$0x1]
  %v121 = vperm.slane %v119, 0
  %vm123 = vcmask 130048
  %v125 = vsel %vm123, %v38, 0
  %v128 = vsel %vm123, %v40, 0
  %v131 = vsel %vm123, %v42, 0
  %v134 = vsel %vm123, %v44, 0
  %v137 = vsel %vm123, %v46, 0
  %v140 = vsel %vm123, %v48, 0
  %v143 = vsel %vm123, %v50, 0
  %v146 = vsel %vm123, %v52, 0
  %v149 = vsel %vm123, %v54, 0
  %v152 = vsel %vm123, %v56, 0
  %v155 = vsel %vm123, %v58, 0
  %v158 = vsel %vm123, %v60, 0
  %v161 = vsel %vm123, %v62, 0
  %v164 = vsel %vm123, %v64, 0
  %v167 = vsel %vm123, %v66, 0
  %v170 = vsel %vm123, %v68, 0
  %v173 = vsel %vm123, %v70, 0
  %v176 = vsel %vm123, %v72, 0
  %v179 = vsel %vm123, %v74, 0
  %v182 = vsel %vm123, %v76, 0
  %v185 = vsel %vm123, %v78, 0
  %v188 = vsel %vm123, %v80, 0
  %v191 = vsel %vm123, %v82, 0
  %v194 = vsel %vm123, %v84, 0
  %v197 = vsel %vm123, %v86, 0
  %v200 = vsel %vm123, %v88, 0
  %v203 = vsel %vm123, %v90, 0
  %v206 = vsel %vm123, %v92, 0
  %v209 = vsel %vm123, %v94, 0
  %v212 = vsel %vm123, %v96, 0
  %v215 = vsel %vm123, %v98, 0
  %v218 = vsel %vm123, %v100, 0
  %220 = vmatpush.msra.mxu0 %v116
  %221 = vmatpush.msra.mxu0 %v115
  %222 = vmatpush.msra.mxu0 %v114
  %223 = vmatpush.msra.mxu0 %v113
  %224 = vmatpush.msra.mxu0 %v112
  %225 = vmatpush.msra.mxu0 %v111
  %226 = vmatpush.msra.mxu0 %v110
  %227 = vmatpush.msra.mxu0 %v109
  %228 = vmatpush.msra.mxu0 %v108
  %229 = vmatpush.msra.mxu0 %v107
  %230 = vmatpush.msra.mxu0 %v106
  %231 = vmatpush.msra.mxu0 %v105
  %232 = vmatpush.msra.mxu0 %v104
  %233 = vmatpush.msra.mxu0 %v103
  %234 = vmatpush.msra.mxu0 %v102
  %235 = vmatpush.msra.mxu0 %v101
  %236 = vmatmul.f32.gmra.mxu0 %v37
  %v237 = vpop.f32.mrf.mxu0
  %v238 = vadd.f32 %v121, %v237
  %239 = vmatmul.f32.gmra.mxu0 %v39
  %v240 = vpop.f32.mrf.mxu0
  %v241 = vadd.f32 %v121, %v240
  %242 = vmatmul.f32.gmra.mxu0 %v41
  %v243 = vpop.f32.mrf.mxu0
  %v244 = vadd.f32 %v121, %v243
  %245 = vmatmul.f32.gmra.mxu0 %v43
  %v246 = vpop.f32.mrf.mxu0
  %v247 = vadd.f32 %v121, %v246
  %248 = vmatmul.f32.gmra.mxu0 %v45
  %v249 = vpop.f32.mrf.mxu0
  %v250 = vadd.f32 %v121, %v249
  %251 = vmatmul.f32.gmra.mxu0 %v47
  %v252 = vpop.f32.mrf.mxu0
  %v253 = vadd.f32 %v121, %v252
  %254 = vmatmul.f32.gmra.mxu0 %v49
  %v255 = vpop.f32.mrf.mxu0
  %v256 = vadd.f32 %v121, %v255
  %257 = vmatmul.f32.gmra.mxu0 %v51
  %v258 = vpop.f32.mrf.mxu0
  %v259 = vadd.f32 %v121, %v258
  %260 = vmatmul.f32.gmra.mxu0 %v53
  %v261 = vpop.f32.mrf.mxu0
  %v262 = vadd.f32 %v121, %v261
  %263 = vmatmul.f32.gmra.mxu0 %v55
  %v264 = vpop.f32.mrf.mxu0
  %v265 = vadd.f32 %v121, %v264
  %266 = vmatmul.f32.gmra.mxu0 %v57
  %v267 = vpop.f32.mrf.mxu0
  %v268 = vadd.f32 %v121, %v267
  %269 = vmatmul.f32.gmra.mxu0 %v59
  %v270 = vpop.f32.mrf.mxu0
  %v271 = vadd.f32 %v121, %v270
  %272 = vmatmul.f32.gmra.mxu0 %v61
  %v273 = vpop.f32.mrf.mxu0
  %v274 = vadd.f32 %v121, %v273
  %275 = vmatmul.f32.gmra.mxu0 %v63
  %v276 = vpop.f32.mrf.mxu0
  %v277 = vadd.f32 %v121, %v276
  %278 = vmatmul.f32.gmra.mxu0 %v65
  %v279 = vpop.f32.mrf.mxu0
  %v280 = vadd.f32 %v121, %v279
  %281 = vmatmul.f32.gmra.mxu0 %v67
  %v282 = vpop.f32.mrf.mxu0
  %v283 = vadd.f32 %v121, %v282
  %284 = vmatmul.f32.gmra.mxu0 %v69
  %v285 = vpop.f32.mrf.mxu0
  %v286 = vadd.f32 %v121, %v285
  %287 = vmatmul.f32.gmra.mxu0 %v71
  %v288 = vpop.f32.mrf.mxu0
  %v289 = vadd.f32 %v121, %v288
  %290 = vmatmul.f32.gmra.mxu0 %v73
  %v291 = vpop.f32.mrf.mxu0
  %v292 = vadd.f32 %v121, %v291
  %293 = vmatmul.f32.gmra.mxu0 %v75
  %v294 = vpop.f32.mrf.mxu0
  %v295 = vadd.f32 %v121, %v294
  %296 = vmatmul.f32.gmra.mxu0 %v77
  %v297 = vpop.f32.mrf.mxu0
  %v298 = vadd.f32 %v121, %v297
  %299 = vmatmul.f32.gmra.mxu0 %v79
  %v300 = vpop.f32.mrf.mxu0
  %v301 = vadd.f32 %v121, %v300
  %302 = vmatmul.f32.gmra.mxu0 %v81
  %v303 = vpop.f32.mrf.mxu0
  %v304 = vadd.f32 %v121, %v303
  %305 = vmatmul.f32.gmra.mxu0 %v83
  %v306 = vpop.f32.mrf.mxu0
  %v307 = vadd.f32 %v121, %v306
  %308 = vmatmul.f32.gmra.mxu0 %v85
  %v309 = vpop.f32.mrf.mxu0
  %v310 = vadd.f32 %v121, %v309
  %311 = vmatmul.f32.gmra.mxu0 %v87
  %v312 = vpop.f32.mrf.mxu0
  %v313 = vadd.f32 %v121, %v312
  %314 = vmatmul.f32.gmra.mxu0 %v89
  %v315 = vpop.f32.mrf.mxu0
  %v316 = vadd.f32 %v121, %v315
  %317 = vmatmul.f32.gmra.mxu0 %v91
  %v318 = vpop.f32.mrf.mxu0
  %v319 = vadd.f32 %v121, %v318
  %320 = vmatmul.f32.gmra.mxu0 %v93
  %v321 = vpop.f32.mrf.mxu0
  %v322 = vadd.f32 %v121, %v321
  %323 = vmatmul.f32.gmra.mxu0 %v95
  %v324 = vpop.f32.mrf.mxu0
  %v325 = vadd.f32 %v121, %v324
  %326 = vmatmul.f32.gmra.mxu0 %v97
  %v327 = vpop.f32.mrf.mxu0
  %v328 = vadd.f32 %v121, %v327
  %329 = vmatmul.f32.gmra.mxu0 %v99
  %v330 = vpop.f32.mrf.mxu0
  %v331 = vadd.f32 %v121, %v330
  %332 = vdwg.mxu0
  %333 = vmatpush.msra.mxu0 0.0
  %334 = vmatpush.msra.mxu0 0.0
  %335 = vmatpush.msra.mxu0 0.0
  %336 = vmatpush.msra.mxu0 0.0
  %337 = vmatpush.msra.mxu0 0.0
  %338 = vmatpush.msra.mxu0 0.0
  %339 = vmatpush.msra.mxu0 0.0
  %340 = vmatpush.msra.mxu0 0.0
  %341 = vmatpush.msra.mxu0 0.0
  %342 = vmatpush.msra.mxu0 0.0
  %343 = vmatpush.msra.mxu0 0.0
  %344 = vmatpush.msra.mxu0 0.0
  %345 = vmatpush.msra.mxu0 0.0
  %346 = vmatpush.msra.mxu0 0.0
  %347 = vmatpush.msra.mxu0 %v118
  %348 = vmatpush.msra.mxu0 %v117
  %349 = vmatmul.f32.gmra.mxu0 %v125
  %v350 = vpop.f32.mrf.mxu0
  %v351 = vadd.f32 %v238, %v350
  %352 = vmatmul.f32.gmra.mxu0 %v128
  %v353 = vpop.f32.mrf.mxu0
  %v354 = vadd.f32 %v241, %v353
  %355 = vmatmul.f32.gmra.mxu0 %v131
  %v356 = vpop.f32.mrf.mxu0
  %v357 = vadd.f32 %v244, %v356
  %358 = vmatmul.f32.gmra.mxu0 %v134
  %v359 = vpop.f32.mrf.mxu0
  %v360 = vadd.f32 %v247, %v359
  %361 = vmatmul.f32.gmra.mxu0 %v137
  %v362 = vpop.f32.mrf.mxu0
  %v363 = vadd.f32 %v250, %v362
  %364 = vmatmul.f32.gmra.mxu0 %v140
  %v365 = vpop.f32.mrf.mxu0
  %v366 = vadd.f32 %v253, %v365
  %367 = vmatmul.f32.gmra.mxu0 %v143
  %v368 = vpop.f32.mrf.mxu0
  %v369 = vadd.f32 %v256, %v368
  %370 = vmatmul.f32.gmra.mxu0 %v146
  %v371 = vpop.f32.mrf.mxu0
  %v372 = vadd.f32 %v259, %v371
  %373 = vmatmul.f32.gmra.mxu0 %v149
  %v374 = vpop.f32.mrf.mxu0
  %v375 = vadd.f32 %v262, %v374
  %376 = vmatmul.f32.gmra.mxu0 %v152
  %v377 = vpop.f32.mrf.mxu0
  %v378 = vadd.f32 %v265, %v377
  %379 = vmatmul.f32.gmra.mxu0 %v155
  %v380 = vpop.f32.mrf.mxu0
  %v381 = vadd.f32 %v268, %v380
  %382 = vmatmul.f32.gmra.mxu0 %v158
  %v383 = vpop.f32.mrf.mxu0
  %v384 = vadd.f32 %v271, %v383
  %385 = vmatmul.f32.gmra.mxu0 %v161
  %v386 = vpop.f32.mrf.mxu0
  %v387 = vadd.f32 %v274, %v386
  %388 = vmatmul.f32.gmra.mxu0 %v164
  %v389 = vpop.f32.mrf.mxu0
  %v390 = vadd.f32 %v277, %v389
  %391 = vmatmul.f32.gmra.mxu0 %v167
  %v392 = vpop.f32.mrf.mxu0
  %v393 = vadd.f32 %v280, %v392
  %394 = vmatmul.f32.gmra.mxu0 %v170
  %v395 = vpop.f32.mrf.mxu0
  %v396 = vadd.f32 %v283, %v395
  %397 = vmatmul.f32.gmra.mxu0 %v173
  %v398 = vpop.f32.mrf.mxu0
  %v399 = vadd.f32 %v286, %v398
  %400 = vmatmul.f32.gmra.mxu0 %v176
  %v401 = vpop.f32.mrf.mxu0
  %v402 = vadd.f32 %v289, %v401
  %403 = vmatmul.f32.gmra.mxu0 %v179
  %v404 = vpop.f32.mrf.mxu0
  %v405 = vadd.f32 %v292, %v404
  %406 = vmatmul.f32.gmra.mxu0 %v182
  %v407 = vpop.f32.mrf.mxu0
  %v408 = vadd.f32 %v295, %v407
  %409 = vmatmul.f32.gmra.mxu0 %v185
  %v410 = vpop.f32.mrf.mxu0
  %v411 = vadd.f32 %v298, %v410
  %412 = vmatmul.f32.gmra.mxu0 %v188
  %v413 = vpop.f32.mrf.mxu0
  %v414 = vadd.f32 %v301, %v413
  %415 = vmatmul.f32.gmra.mxu0 %v191
  %v416 = vpop.f32.mrf.mxu0
  %v417 = vadd.f32 %v304, %v416
  %418 = vmatmul.f32.gmra.mxu0 %v194
  %v419 = vpop.f32.mrf.mxu0
  %v420 = vadd.f32 %v307, %v419
  %421 = vmatmul.f32.gmra.mxu0 %v197
  %v422 = vpop.f32.mrf.mxu0
  %v423 = vadd.f32 %v310, %v422
  %424 = vmatmul.f32.gmra.mxu0 %v200
  %v425 = vpop.f32.mrf.mxu0
  %v426 = vadd.f32 %v313, %v425
  %427 = vmatmul.f32.gmra.mxu0 %v203
  %v428 = vpop.f32.mrf.mxu0
  %v429 = vadd.f32 %v316, %v428
  %430 = vmatmul.f32.gmra.mxu0 %v206
  %v431 = vpop.f32.mrf.mxu0
  %v432 = vadd.f32 %v319, %v431
  %433 = vmatmul.f32.gmra.mxu0 %v209
  %v434 = vpop.f32.mrf.mxu0
  %v435 = vadd.f32 %v322, %v434
  %436 = vmatmul.f32.gmra.mxu0 %v212
  %v437 = vpop.f32.mrf.mxu0
  %v438 = vadd.f32 %v325, %v437
  %439 = vmatmul.f32.gmra.mxu0 %v215
  %v440 = vpop.f32.mrf.mxu0
  %v441 = vadd.f32 %v328, %v440
  %442 = vmatmul.f32.gmra.mxu0 %v218
  %v443 = vpop.f32.mrf.mxu0
  %v444 = vadd.f32 %v331, %v443
  %445 = vdwg.mxu0
  %v446 = vmax.f32 %v351, 0.0
  %v447 = vmax.f32 %v354, 0.0
  %v448 = vmax.f32 %v357, 0.0
  %v449 = vmax.f32 %v360, 0.0
  %v450 = vmax.f32 %v363, 0.0
  %v451 = vmax.f32 %v366, 0.0
  %v452 = vmax.f32 %v369, 0.0
  %v453 = vmax.f32 %v372, 0.0
  %v454 = vmax.f32 %v375, 0.0
  %v455 = vmax.f32 %v378, 0.0
  %v456 = vmax.f32 %v381, 0.0
  %v457 = vmax.f32 %v384, 0.0
  %v458 = vmax.f32 %v387, 0.0
  %v459 = vmax.f32 %v390, 0.0
  %v460 = vmax.f32 %v393, 0.0
  %v461 = vmax.f32 %v396, 0.0
  %v462 = vmax.f32 %v399, 0.0
  %v463 = vmax.f32 %v402, 0.0
  %v464 = vmax.f32 %v405, 0.0
  %v465 = vmax.f32 %v408, 0.0
  %v466 = vmax.f32 %v411, 0.0
  %v467 = vmax.f32 %v414, 0.0
  %v468 = vmax.f32 %v417, 0.0
  %v469 = vmax.f32 %v420, 0.0
  %v470 = vmax.f32 %v423, 0.0
  %v471 = vmax.f32 %v426, 0.0
  %v472 = vmax.f32 %v429, 0.0
  %v473 = vmax.f32 %v432, 0.0
  %v474 = vmax.f32 %v435, 0.0
  %v475 = vmax.f32 %v438, 0.0
  %v476 = vmax.f32 %v441, 0.0
  %v477 = vmax.f32 %v444, 0.0
  %v478 = vld [vmem:[%s4] sm:$0xff]
  %v479 = vld [vmem:[%s4 + $0x8] sm:$0xff]
  %v480 = vld [vmem:[%s4 + $0x10] sm:$0xff]
  %v481 = vld [vmem:[%s4 + $0x18] sm:$0xff]
  %v482 = vld [vmem:[%s4 + $0x20] sm:$0xff]
  %v483 = vld [vmem:[%s4 + $0x28] sm:$0xff]
  %v484 = vld [vmem:[%s4 + $0x30] sm:$0xff]
  %v485 = vld [vmem:[%s4 + $0x38] sm:$0xff]
  %v486 = vld [vmem:[%s5] sm:$0x1]
  %v488 = vperm.slane %v486, 0
  %vm490 = vcmask 523264
  %v492 = vsel %vm490, %v446, 0
  %v495 = vsel %vm490, %v447, 0
  %v498 = vsel %vm490, %v448, 0
  %v501 = vsel %vm490, %v449, 0
  %v504 = vsel %vm490, %v450, 0
  %v507 = vsel %vm490, %v451, 0
  %v510 = vsel %vm490, %v452, 0
  %v513 = vsel %vm490, %v453, 0
  %v516 = vsel %vm490, %v454, 0
  %v519 = vsel %vm490, %v455, 0
  %v522 = vsel %vm490, %v456, 0
  %v525 = vsel %vm490, %v457, 0
  %v528 = vsel %vm490, %v458, 0
  %v531 = vsel %vm490, %v459, 0
  %v534 = vsel %vm490, %v460, 0
  %v537 = vsel %vm490, %v461, 0
  %v540 = vsel %vm490, %v462, 0
  %v543 = vsel %vm490, %v463, 0
  %v546 = vsel %vm490, %v464, 0
  %v549 = vsel %vm490, %v465, 0
  %v552 = vsel %vm490, %v466, 0
  %v555 = vsel %vm490, %v467, 0
  %v558 = vsel %vm490, %v468, 0
  %v561 = vsel %vm490, %v469, 0
  %v564 = vsel %vm490, %v470, 0
  %v567 = vsel %vm490, %v471, 0
  %v570 = vsel %vm490, %v472, 0
  %v573 = vsel %vm490, %v473, 0
  %v576 = vsel %vm490, %v474, 0
  %v579 = vsel %vm490, %v475, 0
  %v582 = vsel %vm490, %v476, 0
  %v585 = vsel %vm490, %v477, 0
  %587 = vmatpush.msra.mxu0 0.0
  %588 = vmatpush.msra.mxu0 0.0
  %589 = vmatpush.msra.mxu0 0.0
  %590 = vmatpush.msra.mxu0 0.0
  %591 = vmatpush.msra.mxu0 0.0
  %592 = vmatpush.msra.mxu0 0.0
  %593 = vmatpush.msra.mxu0 0.0
  %594 = vmatpush.msra.mxu0 0.0
  %595 = vmatpush.msra.mxu0 %v485
  %596 = vmatpush.msra.mxu0 %v484
  %597 = vmatpush.msra.mxu0 %v483
  %598 = vmatpush.msra.mxu0 %v482
  %599 = vmatpush.msra.mxu0 %v481
  %600 = vmatpush.msra.mxu0 %v480
  %601 = vmatpush.msra.mxu0 %v479
  %602 = vmatpush.msra.mxu0 %v478
  %603 = vmatmul.f32.gmra.mxu0 %v492
  %v604 = vpop.f32.mrf.mxu0
  %v605 = vadd.f32 %v488, %v604
  %606 = vmatmul.f32.gmra.mxu0 %v495
  %v607 = vpop.f32.mrf.mxu0
  %v608 = vadd.f32 %v488, %v607
  %609 = vmatmul.f32.gmra.mxu0 %v498
  %v610 = vpop.f32.mrf.mxu0
  %v611 = vadd.f32 %v488, %v610
  %612 = vmatmul.f32.gmra.mxu0 %v501
  %v613 = vpop.f32.mrf.mxu0
  %v614 = vadd.f32 %v488, %v613
  %615 = vmatmul.f32.gmra.mxu0 %v504
  %v616 = vpop.f32.mrf.mxu0
  %v617 = vadd.f32 %v488, %v616
  %618 = vmatmul.f32.gmra.mxu0 %v507
  %v619 = vpop.f32.mrf.mxu0
  %v620 = vadd.f32 %v488, %v619
  %621 = vmatmul.f32.gmra.mxu0 %v510
  %v622 = vpop.f32.mrf.mxu0
  %v623 = vadd.f32 %v488, %v622
  %624 = vmatmul.f32.gmra.mxu0 %v513
  %v625 = vpop.f32.mrf.mxu0
  %v626 = vadd.f32 %v488, %v625
  %627 = vmatmul.f32.gmra.mxu0 %v516
  %v628 = vpop.f32.mrf.mxu0
  %v629 = vadd.f32 %v488, %v628
  %630 = vmatmul.f32.gmra.mxu0 %v519
  %v631 = vpop.f32.mrf.mxu0
  %v632 = vadd.f32 %v488, %v631
  %633 = vmatmul.f32.gmra.mxu0 %v522
  %v634 = vpop.f32.mrf.mxu0
  %v635 = vadd.f32 %v488, %v634
  %636 = vmatmul.f32.gmra.mxu0 %v525
  %v637 = vpop.f32.mrf.mxu0
  %v638 = vadd.f32 %v488, %v637
  %639 = vmatmul.f32.gmra.mxu0 %v528
  %v640 = vpop.f32.mrf.mxu0
  %v641 = vadd.f32 %v488, %v640
  %642 = vmatmul.f32.gmra.mxu0 %v531
  %v643 = vpop.f32.mrf.mxu0
  %v644 = vadd.f32 %v488, %v643
  %645 = vmatmul.f32.gmra.mxu0 %v534
  %v646 = vpop.f32.mrf.mxu0
  %v647 = vadd.f32 %v488, %v646
  %648 = vmatmul.f32.gmra.mxu0 %v537
  %v649 = vpop.f32.mrf.mxu0
  %v650 = vadd.f32 %v488, %v649
  %651 = vmatmul.f32.gmra.mxu0 %v540
  %v652 = vpop.f32.mrf.mxu0
  %v653 = vadd.f32 %v488, %v652
  %654 = vmatmul.f32.gmra.mxu0 %v543
  %v655 = vpop.f32.mrf.mxu0
  %v656 = vadd.f32 %v488, %v655
  %657 = vmatmul.f32.gmra.mxu0 %v546
  %v658 = vpop.f32.mrf.mxu0
  %v659 = vadd.f32 %v488, %v658
  %660 = vmatmul.f32.gmra.mxu0 %v549
  %v661 = vpop.f32.mrf.mxu0
  %v662 = vadd.f32 %v488, %v661
  %663 = vmatmul.f32.gmra.mxu0 %v552
  %v664 = vpop.f32.mrf.mxu0
  %v665 = vadd.f32 %v488, %v664
  %666 = vmatmul.f32.gmra.mxu0 %v555
  %v667 = vpop.f32.mrf.mxu0
  %v668 = vadd.f32 %v488, %v667
  %669 = vmatmul.f32.gmra.mxu0 %v558
  %v670 = vpop.f32.mrf.mxu0
  %v671 = vadd.f32 %v488, %v670
  %672 = vmatmul.f32.gmra.mxu0 %v561
  %v673 = vpop.f32.mrf.mxu0
  %v674 = vadd.f32 %v488, %v673
  %675 = vmatmul.f32.gmra.mxu0 %v564
  %v676 = vpop.f32.mrf.mxu0
  %v677 = vadd.f32 %v488, %v676
  %678 = vmatmul.f32.gmra.mxu0 %v567
  %v679 = vpop.f32.mrf.mxu0
  %v680 = vadd.f32 %v488, %v679
  %681 = vmatmul.f32.gmra.mxu0 %v570
  %v682 = vpop.f32.mrf.mxu0
  %v683 = vadd.f32 %v488, %v682
  %684 = vmatmul.f32.gmra.mxu0 %v573
  %v685 = vpop.f32.mrf.mxu0
  %v686 = vadd.f32 %v488, %v685
  %687 = vmatmul.f32.gmra.mxu0 %v576
  %v688 = vpop.f32.mrf.mxu0
  %v689 = vadd.f32 %v488, %v688
  %690 = vmatmul.f32.gmra.mxu0 %v579
  %v691 = vpop.f32.mrf.mxu0
  %v692 = vadd.f32 %v488, %v691
  %693 = vmatmul.f32.gmra.mxu0 %v582
  %v694 = vpop.f32.mrf.mxu0
  %v695 = vadd.f32 %v488, %v694
  %696 = vmatmul.f32.gmra.mxu0 %v585
  %v697 = vpop.f32.mrf.mxu0
  %v698 = vadd.f32 %v488, %v697
  %699 = vdwg.mxu0
  %v700 = vmax.f32 %v605, 0.0
  %v701 = vmax.f32 %v608, 0.0
  %v702 = vmax.f32 %v611, 0.0
  %v703 = vmax.f32 %v614, 0.0
  %v704 = vmax.f32 %v617, 0.0
  %v705 = vmax.f32 %v620, 0.0
  %v706 = vmax.f32 %v623, 0.0
  %v707 = vmax.f32 %v626, 0.0
  %v708 = vmax.f32 %v629, 0.0
  %v709 = vmax.f32 %v632, 0.0
  %v710 = vmax.f32 %v635, 0.0
  %v711 = vmax.f32 %v638, 0.0
  %v712 = vmax.f32 %v641, 0.0
  %v713 = vmax.f32 %v644, 0.0
  %v714 = vmax.f32 %v647, 0.0
  %v715 = vmax.f32 %v650, 0.0
  %v716 = vmax.f32 %v653, 0.0
  %v717 = vmax.f32 %v656, 0.0
  %v718 = vmax.f32 %v659, 0.0
  %v719 = vmax.f32 %v662, 0.0
  %v720 = vmax.f32 %v665, 0.0
  %v721 = vmax.f32 %v668, 0.0
  %v722 = vmax.f32 %v671, 0.0
  %v723 = vmax.f32 %v674, 0.0
  %v724 = vmax.f32 %v677, 0.0
  %v725 = vmax.f32 %v680, 0.0
  %v726 = vmax.f32 %v683, 0.0
  %v727 = vmax.f32 %v686, 0.0
  %v728 = vmax.f32 %v689, 0.0
  %v729 = vmax.f32 %v692, 0.0
  %v730 = vmax.f32 %v695, 0.0
  %v731 = vmax.f32 %v698, 0.0
  %v732 = vld [vmem:[%s6] sm:$0xff]
  %v733 = vld [vmem:[%s6 + $0x8] sm:$0xff]
  %v734 = vld [vmem:[%s6 + $0x10] sm:$0xff]
  %v735 = vld [vmem:[%s6 + $0x18] sm:$0xff]
  %v736 = vld [vmem:[%s7] sm:$0x1]
  %v738 = vperm.slane %v736, 0
  %vm740 = vcmask 261120
  %v742 = vsel %vm740, %v700, 0
  %v745 = vsel %vm740, %v701, 0
  %v748 = vsel %vm740, %v702, 0
  %v751 = vsel %vm740, %v703, 0
  %v754 = vsel %vm740, %v704, 0
  %v757 = vsel %vm740, %v705, 0
  %v760 = vsel %vm740, %v706, 0
  %v763 = vsel %vm740, %v707, 0
  %v766 = vsel %vm740, %v708, 0
  %v769 = vsel %vm740, %v709, 0
  %v772 = vsel %vm740, %v710, 0
  %v775 = vsel %vm740, %v711, 0
  %v778 = vsel %vm740, %v712, 0
  %v781 = vsel %vm740, %v713, 0
  %v784 = vsel %vm740, %v714, 0
  %v787 = vsel %vm740, %v715, 0
  %v790 = vsel %vm740, %v716, 0
  %v793 = vsel %vm740, %v717, 0
  %v796 = vsel %vm740, %v718, 0
  %v799 = vsel %vm740, %v719, 0
  %v802 = vsel %vm740, %v720, 0
  %v805 = vsel %vm740, %v721, 0
  %v808 = vsel %vm740, %v722, 0
  %v811 = vsel %vm740, %v723, 0
  %v814 = vsel %vm740, %v724, 0
  %v817 = vsel %vm740, %v725, 0
  %v820 = vsel %vm740, %v726, 0
  %v823 = vsel %vm740, %v727, 0
  %v826 = vsel %vm740, %v728, 0
  %v829 = vsel %vm740, %v729, 0
  %v832 = vsel %vm740, %v730, 0
  %v835 = vsel %vm740, %v731, 0
  %837 = vmatpush.msra.mxu0 0.0
  %838 = vmatpush.msra.mxu0 0.0
  %839 = vmatpush.msra.mxu0 0.0
  %840 = vmatpush.msra.mxu0 0.0
  %841 = vmatpush.msra.mxu0 0.0
  %842 = vmatpush.msra.mxu0 0.0
  %843 = vmatpush.msra.mxu0 0.0
  %844 = vmatpush.msra.mxu0 0.0
  %845 = vmatpush.msra.mxu0 0.0
  %846 = vmatpush.msra.mxu0 0.0
  %847 = vmatpush.msra.mxu0 0.0
  %848 = vmatpush.msra.mxu0 0.0
  %849 = vmatpush.msra.mxu0 %v735
  %850 = vmatpush.msra.mxu0 %v734
  %851 = vmatpush.msra.mxu0 %v733
  %852 = vmatpush.msra.mxu0 %v732
  %853 = vmatmul.f32.gmra.mxu0 %v742
  %v854 = vpop.f32.mrf.mxu0
  %v855 = vadd.f32 %v738, %v854
  %856 = vmatmul.f32.gmra.mxu0 %v745
  %v857 = vpop.f32.mrf.mxu0
  %v858 = vadd.f32 %v738, %v857
  %859 = vmatmul.f32.gmra.mxu0 %v748
  %v860 = vpop.f32.mrf.mxu0
  %v861 = vadd.f32 %v738, %v860
  %862 = vmatmul.f32.gmra.mxu0 %v751
  %v863 = vpop.f32.mrf.mxu0
  %v864 = vadd.f32 %v738, %v863
  %865 = vmatmul.f32.gmra.mxu0 %v754
  %v866 = vpop.f32.mrf.mxu0
  %v867 = vadd.f32 %v738, %v866
  %868 = vmatmul.f32.gmra.mxu0 %v757
  %v869 = vpop.f32.mrf.mxu0
  %v870 = vadd.f32 %v738, %v869
  %871 = vmatmul.f32.gmra.mxu0 %v760
  %v872 = vpop.f32.mrf.mxu0
  %v873 = vadd.f32 %v738, %v872
  %874 = vmatmul.f32.gmra.mxu0 %v763
  %v875 = vpop.f32.mrf.mxu0
  %v876 = vadd.f32 %v738, %v875
  %877 = vmatmul.f32.gmra.mxu0 %v766
  %v878 = vpop.f32.mrf.mxu0
  %v879 = vadd.f32 %v738, %v878
  %880 = vmatmul.f32.gmra.mxu0 %v769
  %v881 = vpop.f32.mrf.mxu0
  %v882 = vadd.f32 %v738, %v881
  %883 = vmatmul.f32.gmra.mxu0 %v772
  %v884 = vpop.f32.mrf.mxu0
  %v885 = vadd.f32 %v738, %v884
  %886 = vmatmul.f32.gmra.mxu0 %v775
  %v887 = vpop.f32.mrf.mxu0
  %v888 = vadd.f32 %v738, %v887
  %889 = vmatmul.f32.gmra.mxu0 %v778
  %v890 = vpop.f32.mrf.mxu0
  %v891 = vadd.f32 %v738, %v890
  %892 = vmatmul.f32.gmra.mxu0 %v781
  %v893 = vpop.f32.mrf.mxu0
  %v894 = vadd.f32 %v738, %v893
  %895 = vmatmul.f32.gmra.mxu0 %v784
  %v896 = vpop.f32.mrf.mxu0
  %v897 = vadd.f32 %v738, %v896
  %898 = vmatmul.f32.gmra.mxu0 %v787
  %v899 = vpop.f32.mrf.mxu0
  %v900 = vadd.f32 %v738, %v899
  %901 = vmatmul.f32.gmra.mxu0 %v790
  %v902 = vpop.f32.mrf.mxu0
  %v903 = vadd.f32 %v738, %v902
  %904 = vmatmul.f32.gmra.mxu0 %v793
  %v905 = vpop.f32.mrf.mxu0
  %v906 = vadd.f32 %v738, %v905
  %907 = vmatmul.f32.gmra.mxu0 %v796
  %v908 = vpop.f32.mrf.mxu0
  %v909 = vadd.f32 %v738, %v908
  %910 = vmatmul.f32.gmra.mxu0 %v799
  %v911 = vpop.f32.mrf.mxu0
  %v912 = vadd.f32 %v738, %v911
  %913 = vmatmul.f32.gmra.mxu0 %v802
  %v914 = vpop.f32.mrf.mxu0
  %v915 = vadd.f32 %v738, %v914
  %916 = vmatmul.f32.gmra.mxu0 %v805
  %v917 = vpop.f32.mrf.mxu0
  %v918 = vadd.f32 %v738, %v917
  %919 = vmatmul.f32.gmra.mxu0 %v808
  %v920 = vpop.f32.mrf.mxu0
  %v921 = vadd.f32 %v738, %v920
  %922 = vmatmul.f32.gmra.mxu0 %v811
  %v923 = vpop.f32.mrf.mxu0
  %v924 = vadd.f32 %v738, %v923
  %925 = vmatmul.f32.gmra.mxu0 %v814
  %v926 = vpop.f32.mrf.mxu0
  %v927 = vadd.f32 %v738, %v926
  %928 = vmatmul.f32.gmra.mxu0 %v817
  %v929 = vpop.f32.mrf.mxu0
  %v930 = vadd.f32 %v738, %v929
  %931 = vmatmul.f32.gmra.mxu0 %v820
  %v932 = vpop.f32.mrf.mxu0
  %v933 = vadd.f32 %v738, %v932
  %934 = vmatmul.f32.gmra.mxu0 %v823
  %v935 = vpop.f32.mrf.mxu0
  %v936 = vadd.f32 %v738, %v935
  %937 = vmatmul.f32.gmra.mxu0 %v826
  %v938 = vpop.f32.mrf.mxu0
  %v939 = vadd.f32 %v738, %v938
  %940 = vmatmul.f32.gmra.mxu0 %v829
  %v941 = vpop.f32.mrf.mxu0
  %v942 = vadd.f32 %v738, %v941
  %943 = vmatmul.f32.gmra.mxu0 %v832
  %v944 = vpop.f32.mrf.mxu0
  %v945 = vadd.f32 %v738, %v944
  %946 = vmatmul.f32.gmra.mxu0 %v835
  %v947 = vpop.f32.mrf.mxu0
  %v948 = vadd.f32 %v738, %v947
  %949 = vdwg.mxu0
  %v950 = vmax.f32 %v855, 0.0
  %v951 = vmax.f32 %v858, 0.0
  %v952 = vmax.f32 %v861, 0.0
  %v953 = vmax.f32 %v864, 0.0
  %v954 = vmax.f32 %v867, 0.0
  %v955 = vmax.f32 %v870, 0.0
  %v956 = vmax.f32 %v873, 0.0
  %v957 = vmax.f32 %v876, 0.0
  %v958 = vmax.f32 %v879, 0.0
  %v959 = vmax.f32 %v882, 0.0
  %v960 = vmax.f32 %v885, 0.0
  %v961 = vmax.f32 %v888, 0.0
  %v962 = vmax.f32 %v891, 0.0
  %v963 = vmax.f32 %v894, 0.0
  %v964 = vmax.f32 %v897, 0.0
  %v965 = vmax.f32 %v900, 0.0
  %v966 = vmax.f32 %v903, 0.0
  %v967 = vmax.f32 %v906, 0.0
  %v968 = vmax.f32 %v909, 0.0
  %v969 = vmax.f32 %v912, 0.0
  %v970 = vmax.f32 %v915, 0.0
  %v971 = vmax.f32 %v918, 0.0
  %v972 = vmax.f32 %v921, 0.0
  %v973 = vmax.f32 %v924, 0.0
  %v974 = vmax.f32 %v927, 0.0
  %v975 = vmax.f32 %v930, 0.0
  %v976 = vmax.f32 %v933, 0.0
  %v977 = vmax.f32 %v936, 0.0
  %v978 = vmax.f32 %v939, 0.0
  %v979 = vmax.f32 %v942, 0.0
  %v980 = vmax.f32 %v945, 0.0
  %v981 = vmax.f32 %v948, 0.0
  %v982 = vsub.f32 %v950, %v966
  %v983 = vsub.f32 %v951, %v967
  %v984 = vsub.f32 %v952, %v968
  %v985 = vsub.f32 %v953, %v969
  %v986 = vsub.f32 %v954, %v970
  %v987 = vsub.f32 %v955, %v971
  %v988 = vsub.f32 %v956, %v972
  %v989 = vsub.f32 %v957, %v973
  %v990 = vsub.f32 %v958, %v974
  %v991 = vsub.f32 %v959, %v975
  %v992 = vsub.f32 %v960, %v976
  %v993 = vsub.f32 %v961, %v977
  %v994 = vsub.f32 %v962, %v978
  %v995 = vsub.f32 %v963, %v979
  %v996 = vsub.f32 %v964, %v980
  %v997 = vsub.f32 %v965, %v981
  %v998 = vand.u32 2147483647, %v982
  %v999 = vand.u32 2147483647, %v983
  %v1000 = vand.u32 2147483647, %v984
  %v1001 = vand.u32 2147483647, %v985
  %v1002 = vand.u32 2147483647, %v986
  %v1003 = vand.u32 2147483647, %v987
  %v1004 = vand.u32 2147483647, %v988
  %v1005 = vand.u32 2147483647, %v989
  %v1006 = vand.u32 2147483647, %v990
  %v1007 = vand.u32 2147483647, %v991
  %v1008 = vand.u32 2147483647, %v992
  %v1009 = vand.u32 2147483647, %v993
  %v1010 = vand.u32 2147483647, %v994
  %v1011 = vand.u32 2147483647, %v995
  %v1012 = vand.u32 2147483647, %v996
  %v1013 = vand.u32 2147483647, %v997
  %v1014 = vld [vmem:[%s8] sm:$0x1]
  %v1016 = vperm.slane %v1014, 0
  %v1018 = vmul.f32 %v998, %v1016
  %v1019 = vmul.f32 %v999, %v1016
  %v1020 = vmul.f32 %v1000, %v1016
  %v1021 = vmul.f32 %v1001, %v1016
  %v1022 = vmul.f32 %v1002, %v1016
  %v1023 = vmul.f32 %v1003, %v1016
  %v1024 = vmul.f32 %v1004, %v1016
  %v1025 = vmul.f32 %v1005, %v1016
  %v1026 = vmul.f32 %v1006, %v1016
  %v1027 = vmul.f32 %v1007, %v1016
  %v1028 = vmul.f32 %v1008, %v1016
  %v1029 = vmul.f32 %v1009, %v1016
  %v1030 = vmul.f32 %v1010, %v1016
  %v1031 = vmul.f32 %v1011, %v1016
  %v1032 = vmul.f32 %v1012, %v1016
  %v1033 = vmul.f32 %v1013, %v1016
  %vm1034 = vcmask 64512
  %v1035 = vsel %vm1034, %v1018, 0.0
  %1036 = vadd.xlane.f32.xlu0 %v1035
  %v1037 = vpop.xlane.xlu0 %1036
  %v1038 = vsel %vm1034, %v1019, 0.0
  %1039 = vadd.xlane.f32.xlu0 %v1038
  %v1040 = vpop.xlane.xlu0 %1039
  %v1041 = vsel %vm1034, %v1020, 0.0
  %1042 = vadd.xlane.f32.xlu0 %v1041
  %v1043 = vpop.xlane.xlu0 %1042
  %v1044 = vsel %vm1034, %v1021, 0.0
  %1045 = vadd.xlane.f32.xlu0 %v1044
  %v1046 = vpop.xlane.xlu0 %1045
  %v1047 = vsel %vm1034, %v1022, 0.0
  %1048 = vadd.xlane.f32.xlu0 %v1047
  %v1049 = vpop.xlane.xlu0 %1048
  %v1050 = vsel %vm1034, %v1023, 0.0
  %1051 = vadd.xlane.f32.xlu0 %v1050
  %v1052 = vpop.xlane.xlu0 %1051
  %v1053 = vsel %vm1034, %v1024, 0.0
  %1054 = vadd.xlane.f32.xlu0 %v1053
  %v1055 = vpop.xlane.xlu0 %1054
  %v1056 = vsel %vm1034, %v1025, 0.0
  %1057 = vadd.xlane.f32.xlu0 %v1056
  %v1058 = vpop.xlane.xlu0 %1057
  %v1059 = vsel %vm1034, %v1026, 0.0
  %1060 = vadd.xlane.f32.xlu0 %v1059
  %v1061 = vpop.xlane.xlu0 %1060
  %v1062 = vsel %vm1034, %v1027, 0.0
  %1063 = vadd.xlane.f32.xlu0 %v1062
  %v1064 = vpop.xlane.xlu0 %1063
  %v1065 = vsel %vm1034, %v1028, 0.0
  %1066 = vadd.xlane.f32.xlu0 %v1065
  %v1067 = vpop.xlane.xlu0 %1066
  %v1068 = vsel %vm1034, %v1029, 0.0
  %1069 = vadd.xlane.f32.xlu0 %v1068
  %v1070 = vpop.xlane.xlu0 %1069
  %v1071 = vsel %vm1034, %v1030, 0.0
  %1072 = vadd.xlane.f32.xlu0 %v1071
  %v1073 = vpop.xlane.xlu0 %1072
  %v1074 = vsel %vm1034, %v1031, 0.0
  %1075 = vadd.xlane.f32.xlu0 %v1074
  %v1076 = vpop.xlane.xlu0 %1075
  %v1077 = vsel %vm1034, %v1032, 0.0
  %1078 = vadd.xlane.f32.xlu0 %v1077
  %v1079 = vpop.xlane.xlu0 %1078
  %v1080 = vsel %vm1034, %v1033, 0.0
  %1081 = vadd.xlane.f32.xlu0 %v1080
  %v1082 = vpop.xlane.xlu0 %1081
  %v1083 = vld [vmem:[#allocation2] sm:$0x1]
  %v1085 = vperm.slane %v1083, 0
  %v1087 = vadd.f32 %v1037, %v1085
  %v1088 = vadd.f32 %v1040, %v1085
  %v1089 = vadd.f32 %v1043, %v1085
  %v1090 = vadd.f32 %v1046, %v1085
  %v1091 = vadd.f32 %v1049, %v1085
  %v1092 = vadd.f32 %v1052, %v1085
  %v1093 = vadd.f32 %v1055, %v1085
  %v1094 = vadd.f32 %v1058, %v1085
  %v1095 = vadd.f32 %v1061, %v1085
  %v1096 = vadd.f32 %v1064, %v1085
  %v1097 = vadd.f32 %v1067, %v1085
  %v1098 = vadd.f32 %v1070, %v1085
  %v1099 = vadd.f32 %v1073, %v1085
  %v1100 = vadd.f32 %v1076, %v1085
  %v1101 = vadd.f32 %v1079, %v1085
  %v1102 = vadd.f32 %v1082, %v1085
  %vm1103 = vcmask 7168
  %1104 = vst.msk [vmem:[%s10] sm:$0xff] %vm1103, %v1087
  %1105 = vst.msk [vmem:[%s10 + $0x8] sm:$0xff] %vm1103, %v1088
  %1106 = vst.msk [vmem:[%s10 + $0x10] sm:$0xff] %vm1103, %v1089
  %1107 = vst.msk [vmem:[%s10 + $0x18] sm:$0xff] %vm1103, %v1090
  %1108 = vst.msk [vmem:[%s10 + $0x20] sm:$0xff] %vm1103, %v1091
  %1109 = vst.msk [vmem:[%s10 + $0x28] sm:$0xff] %vm1103, %v1092
  %1110 = vst.msk [vmem:[%s10 + $0x30] sm:$0xff] %vm1103, %v1093
  %1111 = vst.msk [vmem:[%s10 + $0x38] sm:$0xff] %vm1103, %v1094
  %1112 = vst.msk [vmem:[%s10 + $0x40] sm:$0xff] %vm1103, %v1095
  %1113 = vst.msk [vmem:[%s10 + $0x48] sm:$0xff] %vm1103, %v1096
  %1114 = vst.msk [vmem:[%s10 + $0x50] sm:$0xff] %vm1103, %v1097
  %1115 = vst.msk [vmem:[%s10 + $0x58] sm:$0xff] %vm1103, %v1098
  %1116 = vst.msk [vmem:[%s10 + $0x60] sm:$0xff] %vm1103, %v1099
  %1117 = vst.msk [vmem:[%s10 + $0x68] sm:$0xff] %vm1103, %v1100
  %1118 = vst.msk [vmem:[%s10 + $0x70] sm:$0xff] %vm1103, %v1101
  %1119 = vst.msk [vmem:[%s10 + $0x78] sm:$0xff] %vm1103, %v1102
  // Predicated region
  $region42: #{tpu_custom_call.1} parent=0 // pred_check
    _
  $region43: #{tpu_custom_call.1} parent=0 // pred_check_branch
    %1121 = sbr.rel (0) target = $region45
  $region44: #{tpu_custom_call.1} parent=0 // pred_region
    _
  $region45: #{tpu_custom_call.1} parent=0 // pred_fallthru
    _
  // Predicated region
  $region46: #{tpu_custom_call.1} parent=0 // pred_check
    _
  $region47: #{tpu_custom_call.1} parent=0 // pred_check_branch
    %1123 = sbr.rel (0) target = $region49
  $region48: #{tpu_custom_call.1} parent=0 // pred_region
    _
  $region49: #{tpu_custom_call.1} parent=0 // pred_fallthru
    _

</llo_original>
